<compile_context>
chip_gen: v7x
topology: tpu7x:2x2x1
jax: 0.10.0
libtpu: 0.0.40
codegen_flags: <defaults>
</compile_context>

<pallas_src>
import functools

import numpy as np
import jax
import jax.numpy as jnp
from jax import lax
from jax.experimental import pallas as pl
from jax.experimental.pallas import tpu as pltpu

# ---------------- problem sizes (small, consistent with the module) ----------
N = 2            # batch
PLANES = 8       # "planes"
C4 = PLANES * 4  # inplanes = planes * expansion (so identity residual is valid)
H = 16
W = 16
HW = H * W
NHW = N * HW
EPS = 1e-5


# ------------------------------- kernel --------------------------------------
def bottleneck_kernel(x_ref, w1_ref, w2_ref, w3_ref, b_ref, mask_ref, out_ref):
    # x_ref: (C4, N*HW) -- channels on sublanes, batch*spatial on lanes.
    x = x_ref[...]                                                   # (C4, NHW)
    b = b_ref[...]                                                   # (48, 1)
    b1 = b[0:PLANES]
    b2 = b[PLANES:2 * PLANES]
    b3 = b[2 * PLANES:2 * PLANES + C4]

    # ---- conv1 (1x1, BN scale folded) + bias + relu : channel matmul ----
    h1 = jnp.dot(w1_ref[...], x, preferred_element_type=jnp.float32)  # (P, NHW)
    h1 = jnp.maximum(h1 + b1, 0.0)

    # ---- conv2 (3x3, stride=1, pad=1, BN scale folded) + bias + relu ----
    # The 9 spatial taps are lane rotations of h1.  Concatenate them along the
    # contraction axis, zero out-of-image (and cross-image) lanes with ONE wide
    # mask multiply, and hit the MXU once with K = 9*P = 72.
    slabs = []
    for ky in range(3):
        for kx in range(3):
            off = (ky - 1) * W + (kx - 1)
            slabs.append(h1 if off == 0 else jnp.roll(h1, -off, axis=1))
    cat = jnp.concatenate(slabs, axis=0) * mask_ref[...]              # (72, NHW)
    h2 = jnp.dot(w2_ref[...], cat, preferred_element_type=jnp.float32)  # (P, NHW)
    h2 = jnp.maximum(h2 + b2, 0.0)

    # ---- conv3 (1x1, BN scale folded) + bias + residual add + relu ----
    h3 = jnp.dot(w3_ref[...], h2, preferred_element_type=jnp.float32)   # (C4, NHW)
    out_ref[...] = jnp.maximum(h3 + b3 + x, 0.0).astype(out_ref.dtype)


def bottleneck_pallas(x_nchw, w1, w2, w3, bn1, bn2, bn3):
    """x_nchw: (N, C4, H, W) float32. Returns NCHW output."""
    # Fold eval-mode BatchNorm into per-out-channel scale/bias; scale goes into
    # the conv weights (exact), bias stays as a per-channel add in the kernel.
    def fold(p):
        g, b, m, v = p
        scale = g / jnp.sqrt(v + EPS)
        return scale, b - m * scale

    s1, b1 = fold(bn1)
    s2, b2 = fold(bn2)
    s3, b3 = fold(bn3)

    # Conv weights -> matmul form (output channels on rows), BN scale folded in.
    w1f = w1[:, :, 0, 0] * s1[:, None]                                  # (P, C4)
    # w2: (O, I, 3, 3) -> (O, ky, kx, I) -> (O, 9*I); column index = t*P + i
    w2f = (jnp.transpose(w2, (0, 2, 3, 1)).reshape(PLANES, 9 * PLANES)
           * s2[:, None])                                               # (P, 72)
    w3f = w3[:, :, 0, 0] * s3[:, None]                                  # (C4, P)

    # All three per-channel biases packed into a single constant input.
    bias_pack = jnp.concatenate([b1, b2, b3]).reshape(2 * PLANES + C4, 1)  # (48,1)

    # Zero-padding boundary masks for the 9 taps, replicated across the P input
    # channels (rows) and tiled across the batch (lanes).  Cross-image lane
    # wrap from jnp.roll only occurs at positions these masks already zero.
    pos = np.arange(HW)
    hh, ww = pos // W, pos % W
    masks9 = np.empty((9, HW), np.float32)
    for ky in range(3):
        for kx in range(3):
            dy, dx = ky - 1, kx - 1
            masks9[3 * ky + kx] = ((hh + dy >= 0) & (hh + dy < H) &
                                   (ww + dx >= 0) & (ww + dx < W)
                                   ).astype(np.float32)
    mask72 = jnp.asarray(np.tile(np.repeat(masks9, PLANES, axis=0), (1, N)))  # (72, NHW)

    # Fold the batch into the lane axis: (N, C4, H, W) -> (C4, N*HW).
    x_flat = jnp.transpose(x_nchw, (1, 0, 2, 3)).reshape(C4, NHW)

    vmem = pl.BlockSpec(memory_space=pltpu.MemorySpace.VMEM)
    out_flat = pl.pallas_call(
        bottleneck_kernel,
        out_shape=jax.ShapeDtypeStruct((C4, NHW), jnp.float32),
        in_specs=[vmem] * 6,
        out_specs=vmem,
    )(x_flat, w1f, w2f, w3f, bias_pack, mask72)

    return jnp.transpose(out_flat.reshape(C4, N, H, W), (1, 0, 2, 3))


# --------------------------- pure-JAX reference -------------------------------
def bottleneck_ref(x, w1, w2, w3, bn1, bn2, bn3):
    dn = ('NCHW', 'OIHW', 'NCHW')

    def bn(y, p):
        g, b, m, v = p
        g, b, m, v = (t[None, :, None, None] for t in (g, b, m, v))
        return (y - m) / jnp.sqrt(v + EPS) * g + b

    conv = functools.partial(lax.conv_general_dilated,
                             window_strides=(1, 1),
                             dimension_numbers=dn,
                             precision=lax.Precision.HIGHEST)
    out = conv(x, w1, padding='VALID')
    out = jnp.maximum(bn(out, bn1), 0.0)
    out = conv(out, w2, padding=((1, 1), (1, 1)))
    out = jnp.maximum(bn(out, bn2), 0.0)
    out = conv(out, w3, padding='VALID')
    out = bn(out, bn3)
    return jnp.maximum(out + x, 0.0)


# ------------------------------ main ------------------------------------------
if __name__ == "__main__":
    key = jax.random.PRNGKey(0)
    keys = jax.random.split(key, 16)

    x = jax.random.normal(keys[0], (N, C4, H, W), jnp.float32)

    w1 = 0.1 * jax.random.normal(keys[1], (PLANES, C4, 1, 1), jnp.float32)
    w2 = 0.1 * jax.random.normal(keys[2], (PLANES, PLANES, 3, 3), jnp.float32)
    w3 = 0.1 * jax.random.normal(keys[3], (C4, PLANES, 1, 1), jnp.float32)

    def make_bn(kg, kb, km, kv, c):
        gamma = jax.random.uniform(kg, (c,), jnp.float32, 0.5, 1.5)
        beta = 0.1 * jax.random.normal(kb, (c,), jnp.float32)
        mean = 0.1 * jax.random.normal(km, (c,), jnp.float32)
        var = jax.random.uniform(kv, (c,), jnp.float32, 0.5, 1.5)
        return (gamma, beta, mean, var)

    bn1 = make_bn(keys[4], keys[5], keys[6], keys[7], PLANES)
    bn2 = make_bn(keys[8], keys[9], keys[10], keys[11], PLANES)
    bn3 = make_bn(keys[12], keys[13], keys[14], keys[15], C4)

    out = bottleneck_pallas(x, w1, w2, w3, bn1, bn2, bn3)
    out = jax.block_until_ready(out)

    ref = jax.block_until_ready(bottleneck_ref(x, w1, w2, w3, bn1, bn2, bn3))

    max_err = float(jnp.max(jnp.abs(out - ref)))
    assert out.shape == (N, C4, H, W), out.shape
    assert max_err < 1e-3, f"mismatch vs reference: max |err| = {max_err}"

    print("KERNEL_OK")
</pallas_src>

<mosaic_0001>
module attributes {stable_mosaic.version = 11 : i64} {
  func.func @bottleneck_kernel(%arg0: memref<32x512xf32, #tpu.memory_space<vmem>>, %arg1: memref<8x32xf32, #tpu.memory_space<vmem>>, %arg2: memref<8x72xf32, #tpu.memory_space<vmem>>, %arg3: memref<32x8xf32, #tpu.memory_space<vmem>>, %arg4: memref<48x1xf32, #tpu.memory_space<vmem>>, %arg5: memref<72x512xf32, #tpu.memory_space<vmem>>, %arg6: memref<32x512xf32, #tpu.memory_space<vmem>>) attributes {dimension_semantics = [], scalar_prefetch = 0 : i64, scratch_operands = 0 : i64, tpu.core_type = #tpu.core_type<tc>} {
    %c0 = arith.constant 0 : index
    %c0_0 = arith.constant 0 : index
    %0 = vector.load %arg0[%c0, %c0_0] : memref<32x512xf32, #tpu.memory_space<vmem>>, vector<32x512xf32>
    %c0_1 = arith.constant 0 : index
    %c0_2 = arith.constant 0 : index
    %1 = vector.load %arg4[%c0_1, %c0_2] : memref<48x1xf32, #tpu.memory_space<vmem>>, vector<48x1xf32>
    %2 = vector.extract_strided_slice %1 {offsets = [0, 0], sizes = [8, 1], strides = [1, 1]} : vector<48x1xf32> to vector<8x1xf32>
    %3 = vector.extract_strided_slice %1 {offsets = [8, 0], sizes = [8, 1], strides = [1, 1]} : vector<48x1xf32> to vector<8x1xf32>
    %4 = vector.extract_strided_slice %1 {offsets = [16, 0], sizes = [32, 1], strides = [1, 1]} : vector<48x1xf32> to vector<32x1xf32>
    %c0_3 = arith.constant 0 : index
    %c0_4 = arith.constant 0 : index
    %5 = vector.load %arg1[%c0_3, %c0_4] : memref<8x32xf32, #tpu.memory_space<vmem>>, vector<8x32xf32>
    %cst = arith.constant dense<0.000000e+00> : vector<8x512xf32>
    %6 = tpu.matmul %5, %0, %cst {dimension_numbers = #tpu.dot_dimension_numbers<[1], [0], [0], [1], [0, 0, 1, 1], [], []>} : vector<8x32xf32>, vector<32x512xf32>, vector<8x512xf32> -> vector<8x512xf32>
    %7 = vector.broadcast %2 : vector<8x1xf32> to vector<8x512xf32>
    %8 = arith.addf %6, %7 : vector<8x512xf32>
    %cst_5 = arith.constant 0.000000e+00 : f32
    %9 = vector.broadcast %cst_5 : f32 to vector<8x512xf32>
    %10 = arith.maximumf %8, %9 : vector<8x512xf32>
    %11 = vector.extract_strided_slice %10 {offsets = [0, 495], sizes = [8, 17], strides = [1, 1]} : vector<8x512xf32> to vector<8x17xf32>
    %12 = vector.extract_strided_slice %10 {offsets = [0, 0], sizes = [8, 495], strides = [1, 1]} : vector<8x512xf32> to vector<8x495xf32>
    %13 = tpu.concatenate %11, %12 in 1 : vector<8x17xf32>, vector<8x495xf32> -> vector<8x512xf32>
    %14 = vector.extract_strided_slice %10 {offsets = [0, 496], sizes = [8, 16], strides = [1, 1]} : vector<8x512xf32> to vector<8x16xf32>
    %15 = vector.extract_strided_slice %10 {offsets = [0, 0], sizes = [8, 496], strides = [1, 1]} : vector<8x512xf32> to vector<8x496xf32>
    %16 = tpu.concatenate %14, %15 in 1 : vector<8x16xf32>, vector<8x496xf32> -> vector<8x512xf32>
    %17 = vector.extract_strided_slice %10 {offsets = [0, 497], sizes = [8, 15], strides = [1, 1]} : vector<8x512xf32> to vector<8x15xf32>
    %18 = vector.extract_strided_slice %10 {offsets = [0, 0], sizes = [8, 497], strides = [1, 1]} : vector<8x512xf32> to vector<8x497xf32>
    %19 = tpu.concatenate %17, %18 in 1 : vector<8x15xf32>, vector<8x497xf32> -> vector<8x512xf32>
    %20 = vector.extract_strided_slice %10 {offsets = [0, 511], sizes = [8, 1], strides = [1, 1]} : vector<8x512xf32> to vector<8x1xf32>
    %21 = vector.extract_strided_slice %10 {offsets = [0, 0], sizes = [8, 511], strides = [1, 1]} : vector<8x512xf32> to vector<8x511xf32>
    %22 = tpu.concatenate %20, %21 in 1 : vector<8x1xf32>, vector<8x511xf32> -> vector<8x512xf32>
    %23 = vector.extract_strided_slice %10 {offsets = [0, 1], sizes = [8, 511], strides = [1, 1]} : vector<8x512xf32> to vector<8x511xf32>
    %24 = vector.extract_strided_slice %10 {offsets = [0, 0], sizes = [8, 1], strides = [1, 1]} : vector<8x512xf32> to vector<8x1xf32>
    %25 = tpu.concatenate %23, %24 in 1 : vector<8x511xf32>, vector<8x1xf32> -> vector<8x512xf32>
    %26 = vector.extract_strided_slice %10 {offsets = [0, 15], sizes = [8, 497], strides = [1, 1]} : vector<8x512xf32> to vector<8x497xf32>
    %27 = vector.extract_strided_slice %10 {offsets = [0, 0], sizes = [8, 15], strides = [1, 1]} : vector<8x512xf32> to vector<8x15xf32>
    %28 = tpu.concatenate %26, %27 in 1 : vector<8x497xf32>, vector<8x15xf32> -> vector<8x512xf32>
    %29 = vector.extract_strided_slice %10 {offsets = [0, 16], sizes = [8, 496], strides = [1, 1]} : vector<8x512xf32> to vector<8x496xf32>
    %30 = vector.extract_strided_slice %10 {offsets = [0, 0], sizes = [8, 16], strides = [1, 1]} : vector<8x512xf32> to vector<8x16xf32>
    %31 = tpu.concatenate %29, %30 in 1 : vector<8x496xf32>, vector<8x16xf32> -> vector<8x512xf32>
    %32 = vector.extract_strided_slice %10 {offsets = [0, 17], sizes = [8, 495], strides = [1, 1]} : vector<8x512xf32> to vector<8x495xf32>
    %33 = vector.extract_strided_slice %10 {offsets = [0, 0], sizes = [8, 17], strides = [1, 1]} : vector<8x512xf32> to vector<8x17xf32>
    %34 = tpu.concatenate %32, %33 in 1 : vector<8x495xf32>, vector<8x17xf32> -> vector<8x512xf32>
    %35 = tpu.concatenate %13, %16, %19, %22, %10, %25, %28, %31, %34 in 0 : vector<8x512xf32>, vector<8x512xf32>, vector<8x512xf32>, vector<8x512xf32>, vector<8x512xf32>, vector<8x512xf32>, vector<8x512xf32>, vector<8x512xf32>, vector<8x512xf32> -> vector<72x512xf32>
    %c0_6 = arith.constant 0 : index
    %c0_7 = arith.constant 0 : index
    %36 = vector.load %arg5[%c0_6, %c0_7] : memref<72x512xf32, #tpu.memory_space<vmem>>, vector<72x512xf32>
    %37 = arith.mulf %35, %36 : vector<72x512xf32>
    %c0_8 = arith.constant 0 : index
    %c0_9 = arith.constant 0 : index
    %38 = vector.load %arg2[%c0_8, %c0_9] : memref<8x72xf32, #tpu.memory_space<vmem>>, vector<8x72xf32>
    %cst_10 = arith.constant dense<0.000000e+00> : vector<8x512xf32>
    %39 = tpu.matmul %38, %37, %cst_10 {dimension_numbers = #tpu.dot_dimension_numbers<[1], [0], [0], [1], [0, 0, 1, 1], [], []>} : vector<8x72xf32>, vector<72x512xf32>, vector<8x512xf32> -> vector<8x512xf32>
    %40 = vector.broadcast %3 : vector<8x1xf32> to vector<8x512xf32>
    %41 = arith.addf %39, %40 : vector<8x512xf32>
    %cst_11 = arith.constant 0.000000e+00 : f32
    %42 = vector.broadcast %cst_11 : f32 to vector<8x512xf32>
    %43 = arith.maximumf %41, %42 : vector<8x512xf32>
    %c0_12 = arith.constant 0 : index
    %c0_13 = arith.constant 0 : index
    %44 = vector.load %arg3[%c0_12, %c0_13] : memref<32x8xf32, #tpu.memory_space<vmem>>, vector<32x8xf32>
    %cst_14 = arith.constant dense<0.000000e+00> : vector<32x512xf32>
    %45 = tpu.matmul %44, %43, %cst_14 {dimension_numbers = #tpu.dot_dimension_numbers<[1], [0], [0], [1], [0, 0, 1, 1], [], []>} : vector<32x8xf32>, vector<8x512xf32>, vector<32x512xf32> -> vector<32x512xf32>
    %46 = vector.broadcast %4 : vector<32x1xf32> to vector<32x512xf32>
    %47 = arith.addf %45, %46 : vector<32x512xf32>
    %48 = arith.addf %47, %0 : vector<32x512xf32>
    %cst_15 = arith.constant 0.000000e+00 : f32
    %49 = vector.broadcast %cst_15 : f32 to vector<32x512xf32>
    %50 = arith.maximumf %48, %49 : vector<32x512xf32>
    %c0_16 = arith.constant 0 : index
    %c0_17 = arith.constant 0 : index
    %51 = vector.load %arg6[%c0_16, %c0_17] : memref<32x512xf32, #tpu.memory_space<vmem>>, vector<32x512xf32>
    tpu.vector_store %arg6[%c0_16, %c0_17], %50 {strides = array<i32>} : memref<32x512xf32, #tpu.memory_space<vmem>>, vector<32x512xf32>,
    return
  }
}

</mosaic_0001>

<llo_original>
// kernel: tpu_custom_call.1
$region0: #{tpu_custom_call.1}
  #allocation0 [shape = 'u32[]', space=smem, size = 0x4, offset = 0x4, fixed_abs, tag = 'smem constant byte address 0x4 - core index']
  #allocation1 [shape = 'u32[144,128]{1,0:T(1,128)}', space=vmem, size = 0x12000, scoped, tag = 'internal scratch']
  %s0 = inlined_call_operand.hbm [shape: f32[32,512], index: 0, kind: input, shape index: {}]
  %s1 = inlined_call_operand.vmem [shape: f32[8,32], index: 1, kind: input, shape index: {}]
  %s2 = inlined_call_operand.vmem [shape: f32[8,72], index: 2, kind: input, shape index: {}]
  %s3 = inlined_call_operand.vmem [shape: f32[32,8], index: 3, kind: input, shape index: {}]
  %s4 = inlined_call_operand.vmem [shape: f32[48,1], index: 4, kind: input, shape index: {}]
  %s5 = inlined_call_operand.hbm [shape: f32[72,512], index: 5, kind: input, shape index: {}]
  %s6 = inlined_call_operand.hbm [shape: f32[32,512], index: 6, kind: output, shape index: {}]
  %s7 = sld [smem:[#allocation0]]
  $region42: #{tpu_custom_call.1} parent=0
    _
  %s9 = ssub.s32 1, %s7
  %s10 = scalar_select 0, %s9, %s7
  $region1: #{tpu_custom_call.1} parent=0
    #allocation2 [shape = 'u8[65536]{0}', space=vmem, size = 0x10000, scoped, tag = 'input window, operand 0, single buffered']
    #allocation3 [shape = 's32[1]{0}', space=sflag, size = 0x4, scoped, tag = 'scoped memory for tpu_custom_call.1']
    #allocation4 [shape = 's32[1]{0}', space=sflag, size = 0x4, scoped, tag = 'scoped memory for tpu_custom_call.1']
    #allocation5 [shape = 'u8[147456]{0}', space=vmem, size = 0x24000, scoped, tag = 'input window, operand 5, single buffered']
    #allocation6 [shape = 's32[1]{0}', space=sflag, size = 0x4, scoped, tag = 'scoped memory for tpu_custom_call.1']
    #allocation7 [shape = 'u8[65536]{0}', space=vmem, size = 0x10000, scoped, tag = 'output window, operand 0, single buffered']
    %11 = vsyncpa [#allocation3], 0
    %12 = vsyncpa [#allocation6], 0
    %13 = vsyncpa [#allocation4], 0
    // Predicated region
    $region2: #{tpu_custom_call.1} parent=1 // pred_check
      _
    $region3: #{tpu_custom_call.1} parent=1 // pred_check_branch
      %15 = sbr.rel (0) target = $region5
    $region4: #{tpu_custom_call.1} parent=1 // pred_region
      %s17 = ssub.s32 2048, 2048
      %18 = vsyncadd [#allocation3], %s17
      %s19 = sshll.u32 [#allocation2], 4
      %s20 = int_to_ptr.vmem [resolvable:$true] %s19
      %25 = dma.hbm_to_vmem [thread:$0]  %s0, 2048, %s20, [#allocation3], 512, 512, 32
    $region5: #{tpu_custom_call.1} parent=1 // pred_fallthru
      _
    // Predicated region
    $region6: #{tpu_custom_call.1} parent=1 // pred_check
      _
    $region7: #{tpu_custom_call.1} parent=1 // pred_check_branch
      %27 = sbr.rel (0) target = $region9
    $region8: #{tpu_custom_call.1} parent=1 // pred_region
      _
    $region9: #{tpu_custom_call.1} parent=1 // pred_fallthru
      _
    // Predicated region
    $region10: #{tpu_custom_call.1} parent=1 // pred_check
      _
    $region11: #{tpu_custom_call.1} parent=1 // pred_check_branch
      %29 = sbr.rel (0) target = $region13
    $region12: #{tpu_custom_call.1} parent=1 // pred_region
      _
    $region13: #{tpu_custom_call.1} parent=1 // pred_fallthru
      _
    // Predicated region
    $region14: #{tpu_custom_call.1} parent=1 // pred_check
      _
    $region15: #{tpu_custom_call.1} parent=1 // pred_check_branch
      %31 = sbr.rel (0) target = $region17
    $region16: #{tpu_custom_call.1} parent=1 // pred_region
      _
    $region17: #{tpu_custom_call.1} parent=1 // pred_fallthru
      _
    // Predicated region
    $region18: #{tpu_custom_call.1} parent=1 // pred_check
      _
    $region19: #{tpu_custom_call.1} parent=1 // pred_check_branch
      %33 = sbr.rel (0) target = $region21
    $region20: #{tpu_custom_call.1} parent=1 // pred_region
      _
    $region21: #{tpu_custom_call.1} parent=1 // pred_fallthru
      _
    // Predicated region
    $region22: #{tpu_custom_call.1} parent=1 // pred_check
      _
    $region23: #{tpu_custom_call.1} parent=1 // pred_check_branch
      %35 = sbr.rel (0) target = $region25
    $region24: #{tpu_custom_call.1} parent=1 // pred_region
      %s37 = ssub.s32 4608, 4608
      %38 = vsyncadd [#allocation6], %s37
      %s39 = sshll.u32 [#allocation5], 4
      %s40 = int_to_ptr.vmem [resolvable:$true] %s39
      %45 = dma.hbm_to_vmem [thread:$0]  %s5, 4608, %s40, [#allocation6], 512, 512, 32
    $region25: #{tpu_custom_call.1} parent=1 // pred_fallthru
      _
    // Predicated region
    $region26: #{tpu_custom_call.1} parent=1 // pred_check
      _
    $region27: #{tpu_custom_call.1} parent=1 // pred_check_branch
      %47 = sbr.rel (0) target = $region29
    $region28: #{tpu_custom_call.1} parent=1 // pred_region
      %48 = dma.done [#allocation3], 2048
    $region29: #{tpu_custom_call.1} parent=1 // pred_fallthru
      _
    // Predicated region
    $region30: #{tpu_custom_call.1} parent=1 // pred_check
      _
    $region31: #{tpu_custom_call.1} parent=1 // pred_check_branch
      %50 = sbr.rel (0) target = $region33
    $region32: #{tpu_custom_call.1} parent=1 // pred_region
      %51 = dma.done [#allocation6], 4608
    $region33: #{tpu_custom_call.1} parent=1 // pred_fallthru
      _
    %v52 = vld [vmem:[#allocation2] sm:$0xff]
    %v53 = vld [vmem:[#allocation2 + $0x8] sm:$0xff]
    %v54 = vld [vmem:[#allocation2 + $0x10] sm:$0xff]
    %v55 = vld [vmem:[#allocation2 + $0x18] sm:$0xff]
    %v56 = vld [vmem:[#allocation2 + $0x20] sm:$0xff]
    %v57 = vld [vmem:[#allocation2 + $0x28] sm:$0xff]
    %v58 = vld [vmem:[#allocation2 + $0x30] sm:$0xff]
    %v59 = vld [vmem:[#allocation2 + $0x38] sm:$0xff]
    %v60 = vld [vmem:[#allocation2 + $0x40] sm:$0xff]
    %v61 = vld [vmem:[#allocation2 + $0x48] sm:$0xff]
    %v62 = vld [vmem:[#allocation2 + $0x50] sm:$0xff]
    %v63 = vld [vmem:[#allocation2 + $0x58] sm:$0xff]
    %v64 = vld [vmem:[#allocation2 + $0x60] sm:$0xff]
    %v65 = vld [vmem:[#allocation2 + $0x68] sm:$0xff]
    %v66 = vld [vmem:[#allocation2 + $0x70] sm:$0xff]
    %v67 = vld [vmem:[#allocation2 + $0x78] sm:$0xff]
    %v68 = vld [vmem:[%s4] sm:$0xff]
    %v69 = vld [vmem:[%s4 + $0x8] sm:$0xff]
    %v70 = vld [vmem:[%s4 + $0x10] sm:$0xff]
    %v71 = vld [vmem:[%s4 + $0x18] sm:$0xff]
    %v72 = vld [vmem:[%s4 + $0x20] sm:$0xff]
    %v73 = vld [vmem:[%s4 + $0x28] sm:$0xff]
    %v74 = vld [vmem:[%s1] sm:$0xff]
    %76 = vset.pattern.permute.xlu0 0
    %77 = vperm.xlu0 %76, %v68
    %v78 = vpop.permute.xlu0 %77
    %vm80 = vcmask 261120
    %v82 = vsel %vm80, %v74, 0
    %84 = vmatprep.subr.mxu0 %v53
    %85 = vmatpush1.msra.mxu0 %v52
    %86 = vmatprep.subr.mxu0 %v57
    %87 = vmatpush1.msra.mxu0 %v56
    %88 = vmatprep.subr.mxu0 %v61
    %89 = vmatpush1.msra.mxu0 %v60
    %90 = vmatprep.subr.mxu0 %v65
    %91 = vmatpush1.msra.mxu0 %v64
    %92 = vmatprep.subr.mxu0 0.0
    %93 = vmatpush1.msra.mxu0 0.0
    %94 = vmatprep.subr.mxu0 0.0
    %95 = vmatpush1.msra.mxu0 0.0
    %96 = vmatprep.subr.mxu0 0.0
    %97 = vmatpush1.msra.mxu0 0.0
    %98 = vmatprep.subr.mxu0 0.0
    %99 = vmatpush1.msra.mxu0 0.0
    %100 = vmatprep.subr.mxu0 0.0
    %101 = vmatpush1.msra.mxu0 0.0
    %102 = vmatprep.subr.mxu0 0.0
    %103 = vmatpush1.msra.mxu0 0.0
    %104 = vmatprep.subr.mxu0 0.0
    %105 = vmatpush1.msra.mxu0 0.0
    %106 = vmatprep.subr.mxu0 0.0
    %107 = vmatpush1.msra.mxu0 0.0
    %108 = vmatprep.subr.mxu0 0.0
    %109 = vmatpush1.msra.mxu0 0.0
    %110 = vmatprep.subr.mxu0 0.0
    %111 = vmatpush1.msra.mxu0 0.0
    %112 = vmatprep.subr.mxu0 0.0
    %113 = vmatpush1.msra.mxu0 0.0
    %114 = vmatprep.subr.mxu0 0.0
    %115 = vmatpush1.msra.mxu0 0.0
    %116 = vmatprep.subr.mxu0 0.0
    %117 = vmatpush1.msra.mxu0 0.0
    %118 = vmatprep.subr.mxu0 0.0
    %119 = vmatpush1.msra.mxu0 0.0
    %120 = vmatprep.subr.mxu0 0.0
    %121 = vmatpush1.msra.mxu0 0.0
    %122 = vmatprep.subr.mxu0 0.0
    %123 = vmatpush1.msra.mxu0 0.0
    %124 = vmatprep.subr.mxu0 0.0
    %125 = vmatpush1.msra.mxu0 0.0
    %126 = vmatprep.subr.mxu0 0.0
    %127 = vmatpush1.msra.mxu0 0.0
    %128 = vmatprep.subr.mxu0 0.0
    %129 = vmatpush1.msra.mxu0 0.0
    %130 = vmatprep.subr.mxu0 0.0
    %131 = vmatpush1.msra.mxu0 0.0
    %132 = vmatprep.subr.mxu0 0.0
    %133 = vmatpush1.msra.mxu0 0.0
    %134 = vmatprep.subr.mxu0 0.0
    %135 = vmatpush1.msra.mxu0 0.0
    %136 = vmatprep.subr.mxu0 0.0
    %137 = vmatpush1.msra.mxu0 0.0
    %138 = vmatprep.subr.mxu0 0.0
    %139 = vmatpush1.msra.mxu0 0.0
    %140 = vmatprep.subr.mxu0 0.0
    %141 = vmatpush1.msra.mxu0 0.0
    %142 = vmatprep.subr.mxu0 0.0
    %143 = vmatpush1.msra.mxu0 0.0
    %144 = vmatprep.subr.mxu0 0.0
    %145 = vmatpush1.msra.mxu0 0.0
    %146 = vmatprep.subr.mxu0 0.0
    %147 = vmatpush1.msra.mxu0 0.0
    %148 = vmatprep.mubr.f32.mxu0 0.0
    %149 = vmatmul.mubr.f32.gmra.mrb[0].mxu0 %v82
    %v150 = vpop.f32.mrb[0].mxu0
    %v151 = vadd.f32 %v78, %v150
    %v152 = vpop.f32.mrb[0].mxu0
    %v153 = vadd.f32 %v78, %v152
    %154 = vdwg.mxu0
    %155 = vmatprep.subr.mxu0 %v55
    %156 = vmatpush1.msra.mxu0 %v54
    %157 = vmatprep.subr.mxu0 %v59
    %158 = vmatpush1.msra.mxu0 %v58
    %159 = vmatprep.subr.mxu0 %v63
    %160 = vmatpush1.msra.mxu0 %v62
    %161 = vmatprep.subr.mxu0 %v67
    %162 = vmatpush1.msra.mxu0 %v66
    %163 = vmatprep.subr.mxu0 0.0
    %164 = vmatpush1.msra.mxu0 0.0
    %165 = vmatprep.subr.mxu0 0.0
    %166 = vmatpush1.msra.mxu0 0.0
    %167 = vmatprep.subr.mxu0 0.0
    %168 = vmatpush1.msra.mxu0 0.0
    %169 = vmatprep.subr.mxu0 0.0
    %170 = vmatpush1.msra.mxu0 0.0
    %171 = vmatprep.subr.mxu0 0.0
    %172 = vmatpush1.msra.mxu0 0.0
    %173 = vmatprep.subr.mxu0 0.0
    %174 = vmatpush1.msra.mxu0 0.0
    %175 = vmatprep.subr.mxu0 0.0
    %176 = vmatpush1.msra.mxu0 0.0
    %177 = vmatprep.subr.mxu0 0.0
    %178 = vmatpush1.msra.mxu0 0.0
    %179 = vmatprep.subr.mxu0 0.0
    %180 = vmatpush1.msra.mxu0 0.0
    %181 = vmatprep.subr.mxu0 0.0
    %182 = vmatpush1.msra.mxu0 0.0
    %183 = vmatprep.subr.mxu0 0.0
    %184 = vmatpush1.msra.mxu0 0.0
    %185 = vmatprep.subr.mxu0 0.0
    %186 = vmatpush1.msra.mxu0 0.0
    %187 = vmatprep.subr.mxu0 0.0
    %188 = vmatpush1.msra.mxu0 0.0
    %189 = vmatprep.subr.mxu0 0.0
    %190 = vmatpush1.msra.mxu0 0.0
    %191 = vmatprep.subr.mxu0 0.0
    %192 = vmatpush1.msra.mxu0 0.0
    %193 = vmatprep.subr.mxu0 0.0
    %194 = vmatpush1.msra.mxu0 0.0
    %195 = vmatprep.subr.mxu0 0.0
    %196 = vmatpush1.msra.mxu0 0.0
    %197 = vmatprep.subr.mxu0 0.0
    %198 = vmatpush1.msra.mxu0 0.0
    %199 = vmatprep.subr.mxu0 0.0
    %200 = vmatpush1.msra.mxu0 0.0
    %201 = vmatprep.subr.mxu0 0.0
    %202 = vmatpush1.msra.mxu0 0.0
    %203 = vmatprep.subr.mxu0 0.0
    %204 = vmatpush1.msra.mxu0 0.0
    %205 = vmatprep.subr.mxu0 0.0
    %206 = vmatpush1.msra.mxu0 0.0
    %207 = vmatprep.subr.mxu0 0.0
    %208 = vmatpush1.msra.mxu0 0.0
    %209 = vmatprep.subr.mxu0 0.0
    %210 = vmatpush1.msra.mxu0 0.0
    %211 = vmatprep.subr.mxu0 0.0
    %212 = vmatpush1.msra.mxu0 0.0
    %213 = vmatprep.subr.mxu0 0.0
    %214 = vmatpush1.msra.mxu0 0.0
    %215 = vmatprep.subr.mxu0 0.0
    %216 = vmatpush1.msra.mxu0 0.0
    %217 = vmatprep.subr.mxu0 0.0
    %218 = vmatpush1.msra.mxu0 0.0
    %219 = vmatprep.mubr.f32.mxu0 0.0
    %220 = vmatmul.mubr.f32.gmra.mrb[0].mxu0 %v82
    %v221 = vpop.f32.mrb[0].mxu0
    %v222 = vadd.f32 %v78, %v221
    %v223 = vpop.f32.mrb[0].mxu0
    %v224 = vadd.f32 %v78, %v223
    %225 = vdwg.mxu0
    %v226 = vmax.f32 %v151, 0.0
    %v227 = vmax.f32 %v153, 0.0
    %v228 = vmax.f32 %v222, 0.0
    %v229 = vmax.f32 %v224, 0.0
    %231 = vrot.lane.b32.xlu0 %v229, 17
    %v232 = vpop.permute.xlu0 %231
    %237 = vrot.lane.b32.xlu0 %v226, 17
    %v238 = vpop.permute.xlu0 %237
    %239 = vrot.lane.b32.xlu0 %v227, 17
    %v240 = vpop.permute.xlu0 %239
    %241 = vrot.lane.b32.xlu0 %v228, 17
    %v242 = vpop.permute.xlu0 %241
    %vm243 = vcmask 138240
    %v244 = vsel %vm243, %v238, %v240
    %v245 = vsel %vm243, %v240, %v242
    %v246 = vsel %vm243, %v242, %v232
    %v251 = vsel %vm243, %v232, %v238
    %252 = vrot.lane.b32.xlu0 %v229, 16
    %v253 = vpop.permute.xlu0 %252
    %255 = vrot.lane.b32.xlu0 %v226, 16
    %v256 = vpop.permute.xlu0 %255
    %257 = vrot.lane.b32.xlu0 %v227, 16
    %v258 = vpop.permute.xlu0 %257
    %259 = vrot.lane.b32.xlu0 %v228, 16
    %v260 = vpop.permute.xlu0 %259
    %vm261 = vcmask 130048
    %v262 = vsel %vm261, %v256, %v258
    %v263 = vsel %vm261, %v258, %v260
    %v264 = vsel %vm261, %v260, %v253
    %v269 = vsel %vm261, %v253, %v256
    %270 = vrot.lane.b32.xlu0 %v229, 15
    %v271 = vpop.permute.xlu0 %270
    %273 = vrot.lane.b32.xlu0 %v226, 15
    %v274 = vpop.permute.xlu0 %273
    %275 = vrot.lane.b32.xlu0 %v227, 15
    %v276 = vpop.permute.xlu0 %275
    %277 = vrot.lane.b32.xlu0 %v228, 15
    %v278 = vpop.permute.xlu0 %277
    %vm279 = vcmask 121856
    %v280 = vsel %vm279, %v274, %v276
    %v281 = vsel %vm279, %v276, %v278
    %v282 = vsel %vm279, %v278, %v271
    %v287 = vsel %vm279, %v271, %v274
    %288 = vrot.lane.b32.xlu0 %v229, 1
    %v289 = vpop.permute.xlu0 %288
    %291 = vrot.lane.b32.xlu0 %v226, 1
    %v292 = vpop.permute.xlu0 %291
    %293 = vrot.lane.b32.xlu0 %v227, 1
    %v294 = vpop.permute.xlu0 %293
    %295 = vrot.lane.b32.xlu0 %v228, 1
    %v296 = vpop.permute.xlu0 %295
    %vm297 = vcmask 7168
    %v298 = vsel %vm297, %v292, %v294
    %v299 = vsel %vm297, %v294, %v296
    %v300 = vsel %vm297, %v296, %v289
    %v305 = vsel %vm297, %v289, %v292
    %306 = vrot.lane.b32.xlu0 %v226, 127
    %v307 = vpop.permute.xlu0 %306
    %308 = vrot.lane.b32.xlu0 %v227, 127
    %v309 = vpop.permute.xlu0 %308
    %310 = vrot.lane.b32.xlu0 %v228, 127
    %v311 = vpop.permute.xlu0 %310
    %312 = vrot.lane.b32.xlu0 %v229, 127
    %v313 = vpop.permute.xlu0 %312
    %vm314 = vcmask 1039360
    %v315 = vsel %vm314, %v307, %v309
    %v316 = vsel %vm314, %v309, %v311
    %v317 = vsel %vm314, %v311, %v313
    %v323 = vsel %vm314, %v313, %v307
    %324 = vrot.lane.b32.xlu0 %v226, 113
    %v325 = vpop.permute.xlu0 %324
    %326 = vrot.lane.b32.xlu0 %v227, 113
    %v327 = vpop.permute.xlu0 %326
    %328 = vrot.lane.b32.xlu0 %v228, 113
    %v329 = vpop.permute.xlu0 %328
    %330 = vrot.lane.b32.xlu0 %v229, 113
    %v331 = vpop.permute.xlu0 %330
    %vm332 = vcmask 924672
    %v333 = vsel %vm332, %v325, %v327
    %v334 = vsel %vm332, %v327, %v329
    %v335 = vsel %vm332, %v329, %v331
    %v341 = vsel %vm332, %v331, %v325
    %342 = vrot.lane.b32.xlu0 %v226, 112
    %v343 = vpop.permute.xlu0 %342
    %344 = vrot.lane.b32.xlu0 %v227, 112
    %v345 = vpop.permute.xlu0 %344
    %346 = vrot.lane.b32.xlu0 %v228, 112
    %v347 = vpop.permute.xlu0 %346
    %348 = vrot.lane.b32.xlu0 %v229, 112
    %v349 = vpop.permute.xlu0 %348
    %vm350 = vcmask 916480
    %v351 = vsel %vm350, %v343, %v345
    %v352 = vsel %vm350, %v345, %v347
    %v353 = vsel %vm350, %v347, %v349
    %v359 = vsel %vm350, %v349, %v343
    %360 = vrot.lane.b32.xlu0 %v226, 111
    %v361 = vpop.permute.xlu0 %360
    %362 = vrot.lane.b32.xlu0 %v227, 111
    %v363 = vpop.permute.xlu0 %362
    %364 = vrot.lane.b32.xlu0 %v228, 111
    %v365 = vpop.permute.xlu0 %364
    %366 = vrot.lane.b32.xlu0 %v229, 111
    %v367 = vpop.permute.xlu0 %366
    %vm368 = vcmask 908288
    %v369 = vsel %vm368, %v361, %v363
    %v370 = vsel %vm368, %v363, %v365
    %v371 = vsel %vm368, %v365, %v367
    %v377 = vsel %vm368, %v367, %v361
    %v378 = vld [vmem:[#allocation5] sm:$0xff]
    %v379 = vld [vmem:[#allocation5 + $0x8] sm:$0xff]
    %v380 = vld [vmem:[#allocation5 + $0x10] sm:$0xff]
    %v381 = vld [vmem:[#allocation5 + $0x18] sm:$0xff]
    %v382 = vld [vmem:[#allocation5 + $0x20] sm:$0xff]
    %v383 = vld [vmem:[#allocation5 + $0x28] sm:$0xff]
    %v384 = vld [vmem:[#allocation5 + $0x30] sm:$0xff]
    %v385 = vld [vmem:[#allocation5 + $0x38] sm:$0xff]
    %v386 = vld [vmem:[#allocation5 + $0x40] sm:$0xff]
    %v387 = vld [vmem:[#allocation5 + $0x48] sm:$0xff]
    %v388 = vld [vmem:[#allocation5 + $0x50] sm:$0xff]
    %v389 = vld [vmem:[#allocation5 + $0x58] sm:$0xff]
    %v390 = vld [vmem:[#allocation5 + $0x60] sm:$0xff]
    %v391 = vld [vmem:[#allocation5 + $0x68] sm:$0xff]
    %v392 = vld [vmem:[#allocation5 + $0x70] sm:$0xff]
    %v393 = vld [vmem:[#allocation5 + $0x78] sm:$0xff]
    %v394 = vld [vmem:[#allocation5 + $0x80] sm:$0xff]
    %v395 = vld [vmem:[#allocation5 + $0x88] sm:$0xff]
    %v396 = vld [vmem:[#allocation5 + $0x90] sm:$0xff]
    %v397 = vld [vmem:[#allocation5 + $0x98] sm:$0xff]
    %v398 = vld [vmem:[#allocation5 + $0xa0] sm:$0xff]
    %v399 = vld [vmem:[#allocation5 + $0xa8] sm:$0xff]
    %v400 = vld [vmem:[#allocation5 + $0xb0] sm:$0xff]
    %v401 = vld [vmem:[#allocation5 + $0xb8] sm:$0xff]
    %v402 = vld [vmem:[#allocation5 + $0xc0] sm:$0xff]
    %v403 = vld [vmem:[#allocation5 + $0xc8] sm:$0xff]
    %v404 = vld [vmem:[#allocation5 + $0xd0] sm:$0xff]
    %v405 = vld [vmem:[#allocation5 + $0xd8] sm:$0xff]
    %v406 = vld [vmem:[#allocation5 + $0xe0] sm:$0xff]
    %v407 = vld [vmem:[#allocation5 + $0xe8] sm:$0xff]
    %v408 = vld [vmem:[#allocation5 + $0xf0] sm:$0xff]
    %v409 = vld [vmem:[#allocation5 + $0xf8] sm:$0xff]
    %v410 = vld [vmem:[#allocation5 + $0x100] sm:$0xff]
    %v411 = vld [vmem:[#allocation5 + $0x108] sm:$0xff]
    %v412 = vld [vmem:[#allocation5 + $0x110] sm:$0xff]
    %v413 = vld [vmem:[#allocation5 + $0x118] sm:$0xff]
    %v414 = vmul.f32 %v251, %v378
    %v415 = vmul.f32 %v244, %v379
    %v416 = vmul.f32 %v245, %v380
    %v417 = vmul.f32 %v246, %v381
    %v418 = vmul.f32 %v269, %v382
    %v419 = vmul.f32 %v262, %v383
    %v420 = vmul.f32 %v263, %v384
    %v421 = vmul.f32 %v264, %v385
    %v422 = vmul.f32 %v287, %v386
    %v423 = vmul.f32 %v280, %v387
    %v424 = vmul.f32 %v281, %v388
    %v425 = vmul.f32 %v282, %v389
    %v426 = vmul.f32 %v305, %v390
    %v427 = vmul.f32 %v298, %v391
    %v428 = vmul.f32 %v299, %v392
    %v429 = vmul.f32 %v300, %v393
    %v430 = vmul.f32 %v226, %v394
    %v431 = vmul.f32 %v227, %v395
    %v432 = vmul.f32 %v228, %v396
    %v433 = vmul.f32 %v229, %v397
    %v434 = vmul.f32 %v315, %v398
    %v435 = vmul.f32 %v316, %v399
    %v436 = vmul.f32 %v317, %v400
    %v437 = vmul.f32 %v323, %v401
    %v438 = vmul.f32 %v333, %v402
    %v439 = vmul.f32 %v334, %v403
    %v440 = vmul.f32 %v335, %v404
    %v441 = vmul.f32 %v341, %v405
    %v442 = vmul.f32 %v351, %v406
    %v443 = vmul.f32 %v352, %v407
    %v444 = vmul.f32 %v353, %v408
    %v445 = vmul.f32 %v359, %v409
    %v446 = vmul.f32 %v369, %v410
    %v447 = vmul.f32 %v370, %v411
    %v448 = vmul.f32 %v371, %v412
    %v449 = vmul.f32 %v377, %v413
    %v450 = vld [vmem:[%s2] sm:$0xff]
    %452 = vset.pattern.permute.xlu0 0
    %453 = vperm.xlu0 %452, %v69
    %v454 = vpop.permute.xlu0 %453
    %vm456 = vcmask 588800
    %v458 = vsel %vm456, %v450, 0
    %460 = vmatprep.subr.mxu0 %v415
    %461 = vmatpush1.msra.mxu0 %v414
    %462 = vmatprep.subr.mxu0 %v419
    %463 = vmatpush1.msra.mxu0 %v418
    %464 = vmatprep.subr.mxu0 %v423
    %465 = vmatpush1.msra.mxu0 %v422
    %466 = vmatprep.subr.mxu0 %v427
    %467 = vmatpush1.msra.mxu0 %v426
    %468 = vmatprep.subr.mxu0 %v431
    %469 = vmatpush1.msra.mxu0 %v430
    %470 = vmatprep.subr.mxu0 %v435
    %471 = vmatpush1.msra.mxu0 %v434
    %472 = vmatprep.subr.mxu0 %v439
    %473 = vmatpush1.msra.mxu0 %v438
    %474 = vmatprep.subr.mxu0 %v443
    %475 = vmatpush1.msra.mxu0 %v442
    %476 = vmatprep.subr.mxu0 %v447
    %477 = vmatpush1.msra.mxu0 %v446
    %478 = vmatprep.subr.mxu0 0.0
    %479 = vmatpush1.msra.mxu0 0.0
    %480 = vmatprep.subr.mxu0 0.0
    %481 = vmatpush1.msra.mxu0 0.0
    %482 = vmatprep.subr.mxu0 0.0
    %483 = vmatpush1.msra.mxu0 0.0
    %484 = vmatprep.subr.mxu0 0.0
    %485 = vmatpush1.msra.mxu0 0.0
    %486 = vmatprep.subr.mxu0 0.0
    %487 = vmatpush1.msra.mxu0 0.0
    %488 = vmatprep.subr.mxu0 0.0
    %489 = vmatpush1.msra.mxu0 0.0
    %490 = vmatprep.subr.mxu0 0.0
    %491 = vmatpush1.msra.mxu0 0.0
    %492 = vmatprep.subr.mxu0 0.0
    %493 = vmatpush1.msra.mxu0 0.0
    %494 = vmatprep.subr.mxu0 0.0
    %495 = vmatpush1.msra.mxu0 0.0
    %496 = vmatprep.subr.mxu0 0.0
    %497 = vmatpush1.msra.mxu0 0.0
    %498 = vmatprep.subr.mxu0 0.0
    %499 = vmatpush1.msra.mxu0 0.0
    %500 = vmatprep.subr.mxu0 0.0
    %501 = vmatpush1.msra.mxu0 0.0
    %502 = vmatprep.subr.mxu0 0.0
    %503 = vmatpush1.msra.mxu0 0.0
    %504 = vmatprep.subr.mxu0 0.0
    %505 = vmatpush1.msra.mxu0 0.0
    %506 = vmatprep.subr.mxu0 0.0
    %507 = vmatpush1.msra.mxu0 0.0
    %508 = vmatprep.subr.mxu0 0.0
    %509 = vmatpush1.msra.mxu0 0.0
    %510 = vmatprep.subr.mxu0 0.0
    %511 = vmatpush1.msra.mxu0 0.0
    %512 = vmatprep.subr.mxu0 0.0
    %513 = vmatpush1.msra.mxu0 0.0
    %514 = vmatprep.subr.mxu0 0.0
    %515 = vmatpush1.msra.mxu0 0.0
    %516 = vmatprep.subr.mxu0 0.0
    %517 = vmatpush1.msra.mxu0 0.0
    %518 = vmatprep.subr.mxu0 0.0
    %519 = vmatpush1.msra.mxu0 0.0
    %520 = vmatprep.subr.mxu0 0.0
    %521 = vmatpush1.msra.mxu0 0.0
    %522 = vmatprep.subr.mxu0 0.0
    %523 = vmatpush1.msra.mxu0 0.0
    %524 = vmatprep.mubr.f32.mxu0 0.0
    %525 = vmatmul.mubr.f32.gmra.mrb[0].mxu0 %v458
    %v526 = vpop.f32.mrb[0].mxu0
    %v527 = vadd.f32 %v454, %v526
    %v528 = vpop.f32.mrb[0].mxu0
    %v529 = vadd.f32 %v454, %v528
    %530 = vdwg.mxu0
    %531 = vmatprep.subr.mxu0 %v417
    %532 = vmatpush1.msra.mxu0 %v416
    %533 = vmatprep.subr.mxu0 %v421
    %534 = vmatpush1.msra.mxu0 %v420
    %535 = vmatprep.subr.mxu0 %v425
    %536 = vmatpush1.msra.mxu0 %v424
    %537 = vmatprep.subr.mxu0 %v429
    %538 = vmatpush1.msra.mxu0 %v428
    %539 = vmatprep.subr.mxu0 %v433
    %540 = vmatpush1.msra.mxu0 %v432
    %541 = vmatprep.subr.mxu0 %v437
    %542 = vmatpush1.msra.mxu0 %v436
    %543 = vmatprep.subr.mxu0 %v441
    %544 = vmatpush1.msra.mxu0 %v440
    %545 = vmatprep.subr.mxu0 %v445
    %546 = vmatpush1.msra.mxu0 %v444
    %547 = vmatprep.subr.mxu0 %v449
    %548 = vmatpush1.msra.mxu0 %v448
    %549 = vmatprep.subr.mxu0 0.0
    %550 = vmatpush1.msra.mxu0 0.0
    %551 = vmatprep.subr.mxu0 0.0
    %552 = vmatpush1.msra.mxu0 0.0
    %553 = vmatprep.subr.mxu0 0.0
    %554 = vmatpush1.msra.mxu0 0.0
    %555 = vmatprep.subr.mxu0 0.0
    %556 = vmatpush1.msra.mxu0 0.0
    %557 = vmatprep.subr.mxu0 0.0
    %558 = vmatpush1.msra.mxu0 0.0
    %559 = vmatprep.subr.mxu0 0.0
    %560 = vmatpush1.msra.mxu0 0.0
    %561 = vmatprep.subr.mxu0 0.0
    %562 = vmatpush1.msra.mxu0 0.0
    %563 = vmatprep.subr.mxu0 0.0
    %564 = vmatpush1.msra.mxu0 0.0
    %565 = vmatprep.subr.mxu0 0.0
    %566 = vmatpush1.msra.mxu0 0.0
    %567 = vmatprep.subr.mxu0 0.0
    %568 = vmatpush1.msra.mxu0 0.0
    %569 = vmatprep.subr.mxu0 0.0
    %570 = vmatpush1.msra.mxu0 0.0
    %571 = vmatprep.subr.mxu0 0.0
    %572 = vmatpush1.msra.mxu0 0.0
    %573 = vmatprep.subr.mxu0 0.0
    %574 = vmatpush1.msra.mxu0 0.0
    %575 = vmatprep.subr.mxu0 0.0
    %576 = vmatpush1.msra.mxu0 0.0
    %577 = vmatprep.subr.mxu0 0.0
    %578 = vmatpush1.msra.mxu0 0.0
    %579 = vmatprep.subr.mxu0 0.0
    %580 = vmatpush1.msra.mxu0 0.0
    %581 = vmatprep.subr.mxu0 0.0
    %582 = vmatpush1.msra.mxu0 0.0
    %583 = vmatprep.subr.mxu0 0.0
    %584 = vmatpush1.msra.mxu0 0.0
    %585 = vmatprep.subr.mxu0 0.0
    %586 = vmatpush1.msra.mxu0 0.0
    %587 = vmatprep.subr.mxu0 0.0
    %588 = vmatpush1.msra.mxu0 0.0
    %589 = vmatprep.subr.mxu0 0.0
    %590 = vmatpush1.msra.mxu0 0.0
    %591 = vmatprep.subr.mxu0 0.0
    %592 = vmatpush1.msra.mxu0 0.0
    %593 = vmatprep.subr.mxu0 0.0
    %594 = vmatpush1.msra.mxu0 0.0
    %595 = vmatprep.mubr.f32.mxu0 0.0
    %596 = vmatmul.mubr.f32.gmra.mrb[0].mxu0 %v458
    %v597 = vpop.f32.mrb[0].mxu0
    %v598 = vadd.f32 %v454, %v597
    %v599 = vpop.f32.mrb[0].mxu0
    %v600 = vadd.f32 %v454, %v599
    %601 = vdwg.mxu0
    %v602 = vmax.f32 %v527, 0.0
    %v603 = vmax.f32 %v529, 0.0
    %v604 = vmax.f32 %v598, 0.0
    %v605 = vmax.f32 %v600, 0.0
    %v606 = vld [vmem:[%s3] sm:$0xff]
    %v607 = vld [vmem:[%s3 + $0x8] sm:$0xff]
    %v608 = vld [vmem:[%s3 + $0x10] sm:$0xff]
    %v609 = vld [vmem:[%s3 + $0x18] sm:$0xff]
    %611 = vset.pattern.permute.xlu0 0
    %612 = vperm.xlu0 %611, %v70
    %v613 = vpop.permute.xlu0 %612
    %616 = vset.pattern.permute.xlu0 0
    %617 = vperm.xlu0 %616, %v71
    %v618 = vpop.permute.xlu0 %617
    %621 = vset.pattern.permute.xlu0 0
    %622 = vperm.xlu0 %621, %v72
    %v623 = vpop.permute.xlu0 %622
    %626 = vset.pattern.permute.xlu0 0
    %627 = vperm.xlu0 %626, %v73
    %v628 = vpop.permute.xlu0 %627
    %vm630 = vcmask 64512
    %v632 = vsel %vm630, %v606, 0
    %v635 = vsel %vm630, %v607, 0
    %v638 = vsel %vm630, %v608, 0
    %v641 = vsel %vm630, %v609, 0
    %643 = vmatprep.subr.mxu0 %v603
    %644 = vmatpush1.msra.mxu0 %v602
    %645 = vmatprep.subr.mxu0 0.0
    %646 = vmatpush1.msra.mxu0 0.0
    %647 = vmatprep.subr.mxu0 0.0
    %648 = vmatpush1.msra.mxu0 0.0
    %649 = vmatprep.subr.mxu0 0.0
    %650 = vmatpush1.msra.mxu0 0.0
    %651 = vmatprep.subr.mxu0 0.0
    %652 = vmatpush1.msra.mxu0 0.0
    %653 = vmatprep.subr.mxu0 0.0
    %654 = vmatpush1.msra.mxu0 0.0
    %655 = vmatprep.subr.mxu0 0.0
    %656 = vmatpush1.msra.mxu0 0.0
    %657 = vmatprep.subr.mxu0 0.0
    %658 = vmatpush1.msra.mxu0 0.0
    %659 = vmatprep.subr.mxu0 0.0
    %660 = vmatpush1.msra.mxu0 0.0
    %661 = vmatprep.subr.mxu0 0.0
    %662 = vmatpush1.msra.mxu0 0.0
    %663 = vmatprep.subr.mxu0 0.0
    %664 = vmatpush1.msra.mxu0 0.0
    %665 = vmatprep.subr.mxu0 0.0
    %666 = vmatpush1.msra.mxu0 0.0
    %667 = vmatprep.subr.mxu0 0.0
    %668 = vmatpush1.msra.mxu0 0.0
    %669 = vmatprep.subr.mxu0 0.0
    %670 = vmatpush1.msra.mxu0 0.0
    %671 = vmatprep.subr.mxu0 0.0
    %672 = vmatpush1.msra.mxu0 0.0
    %673 = vmatprep.subr.mxu0 0.0
    %674 = vmatpush1.msra.mxu0 0.0
    %675 = vmatprep.subr.mxu0 0.0
    %676 = vmatpush1.msra.mxu0 0.0
    %677 = vmatprep.subr.mxu0 0.0
    %678 = vmatpush1.msra.mxu0 0.0
    %679 = vmatprep.subr.mxu0 0.0
    %680 = vmatpush1.msra.mxu0 0.0
    %681 = vmatprep.subr.mxu0 0.0
    %682 = vmatpush1.msra.mxu0 0.0
    %683 = vmatprep.subr.mxu0 0.0
    %684 = vmatpush1.msra.mxu0 0.0
    %685 = vmatprep.subr.mxu0 0.0
    %686 = vmatpush1.msra.mxu0 0.0
    %687 = vmatprep.subr.mxu0 0.0
    %688 = vmatpush1.msra.mxu0 0.0
    %689 = vmatprep.subr.mxu0 0.0
    %690 = vmatpush1.msra.mxu0 0.0
    %691 = vmatprep.subr.mxu0 0.0
    %692 = vmatpush1.msra.mxu0 0.0
    %693 = vmatprep.subr.mxu0 0.0
    %694 = vmatpush1.msra.mxu0 0.0
    %695 = vmatprep.subr.mxu0 0.0
    %696 = vmatpush1.msra.mxu0 0.0
    %697 = vmatprep.subr.mxu0 0.0
    %698 = vmatpush1.msra.mxu0 0.0
    %699 = vmatprep.subr.mxu0 0.0
    %700 = vmatpush1.msra.mxu0 0.0
    %701 = vmatprep.subr.mxu0 0.0
    %702 = vmatpush1.msra.mxu0 0.0
    %703 = vmatprep.subr.mxu0 0.0
    %704 = vmatpush1.msra.mxu0 0.0
    %705 = vmatprep.subr.mxu0 0.0
    %706 = vmatpush1.msra.mxu0 0.0
    %707 = vmatprep.mubr.f32.mxu0 0.0
    %708 = vmatmul.mubr.f32.gmra.mrb[0].mxu0 %v632
    %v709 = vpop.f32.mrb[0].mxu0
    %v710 = vadd.f32 %v613, %v709
    %v711 = vpop.f32.mrb[0].mxu0
    %v712 = vadd.f32 %v613, %v711
    %713 = vmatprep.mubr.f32.mxu0 0.0
    %714 = vmatmul.mubr.f32.gmra.mrb[0].mxu0 %v635
    %v715 = vpop.f32.mrb[0].mxu0
    %v716 = vadd.f32 %v618, %v715
    %v717 = vpop.f32.mrb[0].mxu0
    %v718 = vadd.f32 %v618, %v717
    %719 = vmatprep.mubr.f32.mxu0 0.0
    %720 = vmatmul.mubr.f32.gmra.mrb[0].mxu0 %v638
    %v721 = vpop.f32.mrb[0].mxu0
    %v722 = vadd.f32 %v623, %v721
    %v723 = vpop.f32.mrb[0].mxu0
    %v724 = vadd.f32 %v623, %v723
    %725 = vmatprep.mubr.f32.mxu0 0.0
    %726 = vmatmul.mubr.f32.gmra.mrb[0].mxu0 %v641
    %v727 = vpop.f32.mrb[0].mxu0
    %v728 = vadd.f32 %v628, %v727
    %v729 = vpop.f32.mrb[0].mxu0
    %v730 = vadd.f32 %v628, %v729
    %731 = vdwg.mxu0
    %732 = vmatprep.subr.mxu0 %v605
    %733 = vmatpush1.msra.mxu0 %v604
    %734 = vmatprep.subr.mxu0 0.0
    %735 = vmatpush1.msra.mxu0 0.0
    %736 = vmatprep.subr.mxu0 0.0
    %737 = vmatpush1.msra.mxu0 0.0
    %738 = vmatprep.subr.mxu0 0.0
    %739 = vmatpush1.msra.mxu0 0.0
    %740 = vmatprep.subr.mxu0 0.0
    %741 = vmatpush1.msra.mxu0 0.0
    %742 = vmatprep.subr.mxu0 0.0
    %743 = vmatpush1.msra.mxu0 0.0
    %744 = vmatprep.subr.mxu0 0.0
    %745 = vmatpush1.msra.mxu0 0.0
    %746 = vmatprep.subr.mxu0 0.0
    %747 = vmatpush1.msra.mxu0 0.0
    %748 = vmatprep.subr.mxu0 0.0
    %749 = vmatpush1.msra.mxu0 0.0
    %750 = vmatprep.subr.mxu0 0.0
    %751 = vmatpush1.msra.mxu0 0.0
    %752 = vmatprep.subr.mxu0 0.0
    %753 = vmatpush1.msra.mxu0 0.0
    %754 = vmatprep.subr.mxu0 0.0
    %755 = vmatpush1.msra.mxu0 0.0
    %756 = vmatprep.subr.mxu0 0.0
    %757 = vmatpush1.msra.mxu0 0.0
    %758 = vmatprep.subr.mxu0 0.0
    %759 = vmatpush1.msra.mxu0 0.0
    %760 = vmatprep.subr.mxu0 0.0
    %761 = vmatpush1.msra.mxu0 0.0
    %762 = vmatprep.subr.mxu0 0.0
    %763 = vmatpush1.msra.mxu0 0.0
    %764 = vmatprep.subr.mxu0 0.0
    %765 = vmatpush1.msra.mxu0 0.0
    %766 = vmatprep.subr.mxu0 0.0
    %767 = vmatpush1.msra.mxu0 0.0
    %768 = vmatprep.subr.mxu0 0.0
    %769 = vmatpush1.msra.mxu0 0.0
    %770 = vmatprep.subr.mxu0 0.0
    %771 = vmatpush1.msra.mxu0 0.0
    %772 = vmatprep.subr.mxu0 0.0
    %773 = vmatpush1.msra.mxu0 0.0
    %774 = vmatprep.subr.mxu0 0.0
    %775 = vmatpush1.msra.mxu0 0.0
    %776 = vmatprep.subr.mxu0 0.0
    %777 = vmatpush1.msra.mxu0 0.0
    %778 = vmatprep.subr.mxu0 0.0
    %779 = vmatpush1.msra.mxu0 0.0
    %780 = vmatprep.subr.mxu0 0.0
    %781 = vmatpush1.msra.mxu0 0.0
    %782 = vmatprep.subr.mxu0 0.0
    %783 = vmatpush1.msra.mxu0 0.0
    %784 = vmatprep.subr.mxu0 0.0
    %785 = vmatpush1.msra.mxu0 0.0
    %786 = vmatprep.subr.mxu0 0.0
    %787 = vmatpush1.msra.mxu0 0.0
    %788 = vmatprep.subr.mxu0 0.0
    %789 = vmatpush1.msra.mxu0 0.0
    %790 = vmatprep.subr.mxu0 0.0
    %791 = vmatpush1.msra.mxu0 0.0
    %792 = vmatprep.subr.mxu0 0.0
    %793 = vmatpush1.msra.mxu0 0.0
    %794 = vmatprep.subr.mxu0 0.0
    %795 = vmatpush1.msra.mxu0 0.0
    %796 = vmatprep.mubr.f32.mxu0 0.0
    %797 = vmatmul.mubr.f32.gmra.mrb[0].mxu0 %v632
    %v798 = vpop.f32.mrb[0].mxu0
    %v799 = vadd.f32 %v613, %v798
    %v800 = vpop.f32.mrb[0].mxu0
    %v801 = vadd.f32 %v613, %v800
    %802 = vmatprep.mubr.f32.mxu0 0.0
    %803 = vmatmul.mubr.f32.gmra.mrb[0].mxu0 %v635
    %v804 = vpop.f32.mrb[0].mxu0
    %v805 = vadd.f32 %v618, %v804
    %v806 = vpop.f32.mrb[0].mxu0
    %v807 = vadd.f32 %v618, %v806
    %808 = vmatprep.mubr.f32.mxu0 0.0
    %809 = vmatmul.mubr.f32.gmra.mrb[0].mxu0 %v638
    %v810 = vpop.f32.mrb[0].mxu0
    %v811 = vadd.f32 %v623, %v810
    %v812 = vpop.f32.mrb[0].mxu0
    %v813 = vadd.f32 %v623, %v812
    %814 = vmatprep.mubr.f32.mxu0 0.0
    %815 = vmatmul.mubr.f32.gmra.mrb[0].mxu0 %v641
    %v816 = vpop.f32.mrb[0].mxu0
    %v817 = vadd.f32 %v628, %v816
    %v818 = vpop.f32.mrb[0].mxu0
    %v819 = vadd.f32 %v628, %v818
    %820 = vdwg.mxu0
    %v821 = vadd.f32 %v710, %v52
    %v822 = vadd.f32 %v712, %v53
    %v823 = vadd.f32 %v799, %v54
    %v824 = vadd.f32 %v801, %v55
    %v825 = vadd.f32 %v716, %v56
    %v826 = vadd.f32 %v718, %v57
    %v827 = vadd.f32 %v805, %v58
    %v828 = vadd.f32 %v807, %v59
    %v829 = vadd.f32 %v722, %v60
    %v830 = vadd.f32 %v724, %v61
    %v831 = vadd.f32 %v811, %v62
    %v832 = vadd.f32 %v813, %v63
    %v833 = vadd.f32 %v728, %v64
    %v834 = vadd.f32 %v730, %v65
    %v835 = vadd.f32 %v817, %v66
    %v836 = vadd.f32 %v819, %v67
    %v837 = vmax.f32 %v821, 0.0
    %v838 = vmax.f32 %v822, 0.0
    %v839 = vmax.f32 %v823, 0.0
    %v840 = vmax.f32 %v824, 0.0
    %v841 = vmax.f32 %v825, 0.0
    %v842 = vmax.f32 %v826, 0.0
    %v843 = vmax.f32 %v827, 0.0
    %v844 = vmax.f32 %v828, 0.0
    %v845 = vmax.f32 %v829, 0.0
    %v846 = vmax.f32 %v830, 0.0
    %v847 = vmax.f32 %v831, 0.0
    %v848 = vmax.f32 %v832, 0.0
    %v849 = vmax.f32 %v833, 0.0
    %v850 = vmax.f32 %v834, 0.0
    %v851 = vmax.f32 %v835, 0.0
    %v852 = vmax.f32 %v836, 0.0
    %853 = vst [vmem:[#allocation7] sm:$0xff] %v837
    %854 = vst [vmem:[#allocation7 + $0x8] sm:$0xff] %v838
    %855 = vst [vmem:[#allocation7 + $0x10] sm:$0xff] %v839
    %856 = vst [vmem:[#allocation7 + $0x18] sm:$0xff] %v840
    %857 = vst [vmem:[#allocation7 + $0x20] sm:$0xff] %v841
    %858 = vst [vmem:[#allocation7 + $0x28] sm:$0xff] %v842
    %859 = vst [vmem:[#allocation7 + $0x30] sm:$0xff] %v843
    %860 = vst [vmem:[#allocation7 + $0x38] sm:$0xff] %v844
    %861 = vst [vmem:[#allocation7 + $0x40] sm:$0xff] %v845
    %862 = vst [vmem:[#allocation7 + $0x48] sm:$0xff] %v846
    %863 = vst [vmem:[#allocation7 + $0x50] sm:$0xff] %v847
    %864 = vst [vmem:[#allocation7 + $0x58] sm:$0xff] %v848
    %865 = vst [vmem:[#allocation7 + $0x60] sm:$0xff] %v849
    %866 = vst [vmem:[#allocation7 + $0x68] sm:$0xff] %v850
    %867 = vst [vmem:[#allocation7 + $0x70] sm:$0xff] %v851
    %868 = vst [vmem:[#allocation7 + $0x78] sm:$0xff] %v852
    // Predicated region
    $region34: #{tpu_custom_call.1} parent=1 // pred_check
      _
    $region35: #{tpu_custom_call.1} parent=1 // pred_check_branch
      %870 = sbr.rel (0) target = $region37
    $region36: #{tpu_custom_call.1} parent=1 // pred_region
      %s872 = ssub.s32 2048, 2048
      %873 = vsyncadd [#allocation4], %s872
      %s874 = sshll.u32 [#allocation7], 4
      %s875 = int_to_ptr.vmem [resolvable:$true] %s874
      %880 = dma.vmem_to_hbm [thread:$0]  %s875, 2048, %s6, [#allocation4], 512, 512, 32
    $region37: #{tpu_custom_call.1} parent=1 // pred_fallthru
      _
    // Predicated region
    $region38: #{tpu_custom_call.1} parent=1 // pred_check
      _
    $region39: #{tpu_custom_call.1} parent=1 // pred_check_branch
      %882 = sbr.rel (0) target = $region41
    $region40: #{tpu_custom_call.1} parent=1 // pred_region
      %883 = dma.done [#allocation4], 2048
    $region41: #{tpu_custom_call.1} parent=1 // pred_fallthru
      _
    %884 = vsyncpa [#allocation3], 1
    %885 = vsyncpa [#allocation6], 1
    %886 = vsyncpa [#allocation4], 1

</llo_original>
